<compile_context>
chip_gen: v6e
topology: v6e:2x2x1
jax: 0.10.0
libtpu: 0.0.40
codegen_flags: <defaults>
</compile_context>

<pallas_src>
import functools

import jax
import jax.numpy as jnp
from jax.experimental import pallas as pl
from jax.experimental.pallas import tpu as pltpu

_LANE = 128


def _round_up(x: int, n: int) -> int:
    return ((x + n - 1) // n) * n


def _largest_tile(limit: int, total: int, align: int = _LANE) -> int:
    """Largest multiple of `align` that is <= limit and divides `total`.
    `total` must itself be a multiple of `align`."""
    t = max(align, min(limit, total))
    t = (t // align) * align
    while total % t:
        t -= align
    return t


def _tpu_vmem_capacity_bytes() -> int:
    try:
        return int(pltpu.get_tpu_info().vmem_capacity_bytes)
    except Exception:
        pass
    try:
        kind = jax.devices()[0].device_kind.lower()
    except Exception:
        kind = ""
    if "v5" in kind or "v6" in kind:
        return 128 << 20
    return 64 << 20  # conservative (v7x / unknown)


def _default_tiles(vmem_cap: int):
    kind = ""
    try:
        kind = jax.devices()[0].device_kind.lower()
    except Exception:
        pass
    if "v5 lite" in kind or "v5e" in kind or "v5lite" in kind:
        # v5e: ~240 flops/byte roofline -> tm=256 already balanced; spend VMEM on ti.
        return 256, 1024
    if vmem_cap <= (64 << 20):
        # v7x: only 64 MiB VMEM per TC; keep footprint small, tm big enough for roofline.
        return 512, 256
    # v6e (128 MiB VMEM): amortize weight streaming over tm=512 tokens, big k tiles.
    return 512, 1024


# ----------------------------------------------------------------------------
# Kernels
# ----------------------------------------------------------------------------
def _expert_kernel_acc(x_ref, w1_ref, w2_ref, o_ref, acc_ref):
    """Non-f32 output: accumulate across the intermediate (k) axis in an f32 scratch."""
    k = pl.program_id(1)

    @pl.when(k == 0)
    def _():
        acc_ref[...] = jnp.zeros_like(acc_ref)

    # x @ w1[:, k-tile] on the MXU, f32 accumulation.
    h = jnp.dot(x_ref[...], w1_ref[...], preferred_element_type=jnp.float32)
    # SiLU in f32 (sigmoid exp goes to the EUP slot).
    a = h * jax.nn.sigmoid(h)
    # SiLU(h) @ w2[k-tile, :], accumulate into the f32 scratch.
    acc_ref[...] += jnp.dot(a.astype(w2_ref.dtype), w2_ref[...],
                            preferred_element_type=jnp.float32)

    @pl.when(k == pl.num_programs(1) - 1)
    def _():
        o_ref[...] = acc_ref[...].astype(o_ref.dtype)


def _expert_kernel_f32_out(x_ref, w1_ref, w2_ref, o_ref):
    """f32 output: the output tile (resident across k) doubles as the accumulator."""
    k = pl.program_id(1)

    h = jnp.dot(x_ref[...], w1_ref[...], preferred_element_type=jnp.float32)
    a = h * jax.nn.sigmoid(h)
    contrib = jnp.dot(a.astype(w2_ref.dtype), w2_ref[...],
                      preferred_element_type=jnp.float32)

    @pl.when(k == 0)
    def _():
        o_ref[...] = contrib

    @pl.when(k != 0)
    def _():
        o_ref[...] = o_ref[...] + contrib


# ----------------------------------------------------------------------------
# Wrappers
# ----------------------------------------------------------------------------
def prepare_expert_weights(w1, w2, *, compute_dtype=jnp.bfloat16):
    """Cast + pad the expert weights ONCE (hoist out of the per-call path).

    w1: [hidden, intermediate], w2: [intermediate, hidden] (nn.Linear.weight.T).
    Returns (w1p, w2p, hidden, intermediate); padded dims are multiples of 128.
    Do this at model-load time so repeated forwards don't re-stream the weights.
    """
    H, I = w1.shape
    assert w2.shape == (I, H), (w1.shape, w2.shape)
    hp = _round_up(H, _LANE)
    ip = _round_up(I, _LANE)
    cdt = jnp.dtype(compute_dtype)
    w1p = jnp.pad(w1.astype(cdt), ((0, hp - H), (0, ip - I)))
    w2p = jnp.pad(w2.astype(cdt), ((0, ip - I), (0, hp - H)))
    return w1p, w2p, H, I


@functools.partial(jax.jit, static_argnames=("hidden", "intermediate", "tm", "ti"))
def expert_layer_prepared(x, w1p, w2p, *, hidden, intermediate, tm=None, ti=None):
    """x: [..., hidden]; w1p/w2p come from prepare_expert_weights()."""
    orig_shape = x.shape
    out_dtype = x.dtype
    assert orig_shape[-1] == hidden
    H = hidden
    hp, ip = w1p.shape
    assert w2p.shape == (ip, hp)

    cdt = w1p.dtype
    cbytes = jnp.dtype(cdt).itemsize
    obytes = jnp.dtype(out_dtype).itemsize
    out_is_f32 = jnp.dtype(out_dtype) == jnp.dtype(jnp.float32)

    x2d = x.reshape(-1, H)
    m = x2d.shape[0]

    vmem_cap = _tpu_vmem_capacity_bytes()
    tm_d, ti_d = _default_tiles(vmem_cap)
    tm = tm_d if tm is None else tm
    ti = ti_d if ti is None else ti

    # ---- tile sizing (lane-dense, MXU/packing aligned) ----------------------
    sub = 16 if cbytes == 2 else 8            # bf16 packs 2 rows per sublane
    tm_eff = min(tm, _round_up(m, sub))
    mp = _round_up(m, tm_eff)
    # Megacore / v7x 2-TC: make sure the "parallel" M axis has >= 2 blocks
    # when the token tile is large, so both TensorCores get work.
    if mp // tm_eff < 2 and tm_eff >= 512:
        tm_eff //= 2
        mp = _round_up(m, tm_eff)
    ti_eff = _largest_tile(ti, ip)

    def _footprint(tm_e, ti_e):
        return (2 * tm_e * hp * cbytes                      # x tile (double buffered)
                + 2 * hp * ti_e * cbytes                    # w1 column tile
                + 2 * ti_e * hp * cbytes                    # w2 row tile
                + 2 * tm_e * hp * obytes                    # out tile
                + (0 if out_is_f32 else tm_e * hp * 4)      # f32 accumulator scratch
                + tm_e * ti_e * 6)                          # h (f32) + bf16 copy (internal)

    # Fit the tiling into the actual device VMEM (64 MiB on v7x, 128 MiB v5e/v6e).
    budget = vmem_cap - (16 << 20)
    while _footprint(tm_eff, ti_eff) > budget:
        if ti_eff > 256:
            ti_eff = _largest_tile(ti_eff // 2, ip)
        elif tm_eff > 256:
            tm_eff //= 2
            mp = _round_up(m, tm_eff)
        else:
            break

    grid = (mp // tm_eff, ip // ti_eff)
    num_m_tiles = grid[0]

    # Per-call activation cast/pad only (weights were prepared once, offline).
    # Zero padding is exact: padded w1 rows/cols are zero -> h = 0 -> SiLU(0) = 0
    # -> no contribution through w2; padded rows/cols are sliced off below.
    xd = x2d.astype(cdt)
    if (mp, hp) != (m, H):
        xd = jnp.pad(xd, ((0, mp - m), (0, hp - H)))

    vmem_limit = int(min(max(int(1.1 * _footprint(tm_eff, ti_eff)) + (4 << 20),
                             32 << 20),
                         vmem_cap - (8 << 20)))

    cost = pl.CostEstimate(
        flops=4 * mp * hp * ip,                              # two matmuls, 2 flops/MAC
        transcendentals=mp * ip,                             # sigmoid exp
        bytes_accessed=(num_m_tiles * 2 * hp * ip * cbytes   # weights stream once per M tile
                        + mp * hp * cbytes                   # x
                        + mp * hp * obytes),                 # y
    )

    if out_is_f32:
        kernel = _expert_kernel_f32_out
        scratch = []
    else:
        kernel = _expert_kernel_acc
        scratch = [pltpu.VMEM((tm_eff, hp), jnp.float32)]

    # NOTE: f32 compute path uses default MXU precision (matches previously
    # validated numerics); pass precision=HIGHEST upstream if bit-exactness at
    # very large H/I is required.
    out = pl.pallas_call(
        kernel,
        out_shape=jax.ShapeDtypeStruct((mp, hp), out_dtype),
        grid_spec=pltpu.PrefetchScalarGridSpec(
            num_scalar_prefetch=0,
            grid=grid,
            in_specs=[
                pl.BlockSpec((tm_eff, hp), lambda i, k: (i, 0)),   # x tile (k-resident)
                pl.BlockSpec((hp, ti_eff), lambda i, k: (0, k)),   # w1 column tile
                pl.BlockSpec((ti_eff, hp), lambda i, k: (k, 0)),   # w2 row tile
            ],
            out_specs=pl.BlockSpec((tm_eff, hp), lambda i, k: (i, 0)),
            scratch_shapes=scratch,
        ),
        compiler_params=pltpu.CompilerParams(
            dimension_semantics=("parallel", "arbitrary"),
            vmem_limit_bytes=vmem_limit,
        ),
        cost_estimate=cost,
    )(xd, w1p, w2p)

    return out[:m, :H].reshape(orig_shape)


def expert_layer(x, w1, w2, *, compute_dtype=jnp.bfloat16, tm=None, ti=None):
    """One-shot convenience wrapper.

    For repeated forward calls, hoist prepare_expert_weights() to load time and
    call expert_layer_prepared() directly so the weight cast/pad is not redone
    per call (it would otherwise roughly double HBM traffic).
    """
    w1p, w2p, H, I = prepare_expert_weights(w1, w2, compute_dtype=compute_dtype)
    return expert_layer_prepared(x, w1p, w2p, hidden=H, intermediate=I, tm=tm, ti=ti)


# ----------------------------------------------------------------------------
# References
# ----------------------------------------------------------------------------
def reference_f32(x, w1, w2):
    h = jnp.dot(x, w1)
    a = h * jax.nn.sigmoid(h)
    return jnp.dot(a, w2)


def reference_bf16(x, w1, w2):
    h = jnp.dot(x.astype(jnp.bfloat16), w1.astype(jnp.bfloat16),
                preferred_element_type=jnp.float32)
    a = h * jax.nn.sigmoid(h)
    return jnp.dot(a.astype(jnp.bfloat16), w2.astype(jnp.bfloat16),
                   preferred_element_type=jnp.float32)


if __name__ == "__main__":
    # Small config consistent with the module: hidden_size=32, intermediate_size=64.
    batch, seq, hidden, intermediate = 2, 8, 32, 64

    key = jax.random.PRNGKey(0)
    kx, k1, k2 = jax.random.split(key, 3)

    x = jax.random.normal(kx, (batch, seq, hidden), dtype=jnp.float32)
    # Deterministic synthetic weights (already transposed vs. nn.Linear.weight).
    w1 = jax.random.normal(k1, (hidden, intermediate), dtype=jnp.float32) * (hidden ** -0.5)
    w2 = jax.random.normal(k2, (intermediate, hidden), dtype=jnp.float32) * (intermediate ** -0.5)

    # Production pattern: prepare (cast + pad) the weights ONCE, reuse per call.
    # 1) f32 compute path: output tile doubles as accumulator; match f32 reference.
    w1p32, w2p32, H, I = prepare_expert_weights(w1, w2, compute_dtype=jnp.float32)
    y32 = jax.block_until_ready(
        expert_layer_prepared(x, w1p32, w2p32, hidden=H, intermediate=I))
    y_ref32 = reference_f32(x, w1, w2)
    assert y32.shape == x.shape
    assert jnp.allclose(y32, y_ref32, atol=1e-5, rtol=1e-5), "f32 path mismatch"

    # 2) default bf16-compute path (production): bf16 MXU inputs, f32 accumulation.
    w1pbf, w2pbf, H, I = prepare_expert_weights(w1, w2)   # bf16 by default
    ybf = jax.block_until_ready(
        expert_layer_prepared(x, w1pbf, w2pbf, hidden=H, intermediate=I))
    y_refbf = reference_bf16(x, w1, w2)
    assert ybf.shape == x.shape
    assert jnp.allclose(ybf, y_refbf, atol=1e-2, rtol=1e-2), "bf16 path mismatch"

    # 3) bf16 activations / bf16 output: exercises the separate-accumulator kernel.
    xbf = x.astype(jnp.bfloat16)
    ybf16 = jax.block_until_ready(
        expert_layer_prepared(xbf, w1pbf, w2pbf, hidden=H, intermediate=I))
    assert ybf16.shape == x.shape and ybf16.dtype == jnp.bfloat16
    y_refb = reference_bf16(xbf, w1, w2).astype(jnp.bfloat16)
    assert jnp.allclose(ybf16.astype(jnp.float32), y_refb.astype(jnp.float32),
                        atol=2e-2, rtol=2e-2), "bf16-out path mismatch"

    # 4) convenience one-shot wrapper still works.
    y1 = jax.block_until_ready(expert_layer(x, w1, w2))
    assert jnp.allclose(y1, y_refbf, atol=1e-2, rtol=1e-2), "wrapper path mismatch"

    print("KERNEL_OK")
</pallas_src>

<mosaic_0001>
module attributes {stable_mosaic.version = 11 : i64} {
  func.func @_expert_kernel_f32_out(%arg0: i32, %arg1: i32, %arg2: memref<16x128xf32, #tpu.memory_space<vmem>>, %arg3: memref<128x128xf32, #tpu.memory_space<vmem>>, %arg4: memref<128x128xf32, #tpu.memory_space<vmem>>, %arg5: memref<16x128xf32, #tpu.memory_space<vmem>>) attributes {dimension_semantics = [#tpu.dimension_semantics<parallel>, #tpu.dimension_semantics<arbitrary>], iteration_bounds = array<i64: 1, 1>, scalar_prefetch = 0 : i64, scratch_operands = 0 : i64, tpu.core_type = #tpu.core_type<tc>, window_params = [{transform_indices = @transform_0, window_bounds = array<i64: 16, 128>}, {transform_indices = @transform_1, window_bounds = array<i64: 128, 128>}, {transform_indices = @transform_2, window_bounds = array<i64: 128, 128>}, {transform_indices = @transform_3, window_bounds = array<i64: 16, 128>}]} {
    %c0 = arith.constant 0 : index
    %c0_0 = arith.constant 0 : index
    %0 = vector.load %arg2[%c0, %c0_0] : memref<16x128xf32, #tpu.memory_space<vmem>>, vector<16x128xf32>
    %c0_1 = arith.constant 0 : index
    %c0_2 = arith.constant 0 : index
    %1 = vector.load %arg3[%c0_1, %c0_2] : memref<128x128xf32, #tpu.memory_space<vmem>>, vector<128x128xf32>
    %cst = arith.constant dense<0.000000e+00> : vector<16x128xf32>
    %2 = tpu.matmul %0, %1, %cst {dimension_numbers = #tpu.dot_dimension_numbers<[1], [0], [0], [1], [0, 0, 1, 1], [], []>} : vector<16x128xf32>, vector<128x128xf32>, vector<16x128xf32> -> vector<16x128xf32>
    %3 = arith.negf %2 : vector<16x128xf32>
    %4 = math.exp %3 : vector<16x128xf32>
    %cst_3 = arith.constant 1.000000e+00 : f32
    %5 = vector.broadcast %cst_3 : f32 to vector<16x128xf32>
    %6 = arith.addf %5, %4 : vector<16x128xf32>
    %7 = arith.divf %5, %6 : vector<16x128xf32>
    %8 = arith.mulf %2, %7 : vector<16x128xf32>
    %c0_4 = arith.constant 0 : index
    %c0_5 = arith.constant 0 : index
    %9 = vector.load %arg4[%c0_4, %c0_5] : memref<128x128xf32, #tpu.memory_space<vmem>>, vector<128x128xf32>
    %cst_6 = arith.constant dense<0.000000e+00> : vector<16x128xf32>
    %10 = tpu.matmul %8, %9, %cst_6 {dimension_numbers = #tpu.dot_dimension_numbers<[1], [0], [0], [1], [0, 0, 1, 1], [], []>} : vector<16x128xf32>, vector<128x128xf32>, vector<16x128xf32> -> vector<16x128xf32>
    %c0_i32 = arith.constant 0 : i32
    %11 = arith.cmpi eq, %arg1, %c0_i32 : i32
    %12 = arith.extui %11 : i1 to i32
    %c0_i32_7 = arith.constant 0 : i32
    %13 = arith.cmpi ne, %12, %c0_i32_7 : i32
    scf.if %13 {
      %c0_10 = arith.constant 0 : index
      %c0_11 = arith.constant 0 : index
      %17 = vector.load %arg5[%c0_10, %c0_11] : memref<16x128xf32, #tpu.memory_space<vmem>>, vector<16x128xf32>
      tpu.vector_store %arg5[%c0_10, %c0_11], %10 {strides = array<i32>} : memref<16x128xf32, #tpu.memory_space<vmem>>, vector<16x128xf32>,
    } else {
    }
    %c0_i32_8 = arith.constant 0 : i32
    %14 = arith.cmpi ne, %arg1, %c0_i32_8 : i32
    %15 = arith.extui %14 : i1 to i32
    %c0_i32_9 = arith.constant 0 : i32
    %16 = arith.cmpi ne, %15, %c0_i32_9 : i32
    scf.if %16 {
      %c0_10 = arith.constant 0 : index
      %c0_11 = arith.constant 0 : index
      %17 = vector.load %arg5[%c0_10, %c0_11] : memref<16x128xf32, #tpu.memory_space<vmem>>, vector<16x128xf32>
      %18 = arith.addf %17, %10 : vector<16x128xf32>
      %c0_12 = arith.constant 0 : index
      %c0_13 = arith.constant 0 : index
      %19 = vector.load %arg5[%c0_12, %c0_13] : memref<16x128xf32, #tpu.memory_space<vmem>>, vector<16x128xf32>
      tpu.vector_store %arg5[%c0_12, %c0_13], %18 {strides = array<i32>} : memref<16x128xf32, #tpu.memory_space<vmem>>, vector<16x128xf32>,
    } else {
    }
    return
  }
  func.func @transform_0(%arg0: i32, %arg1: i32) -> (i32, i32) {
    %c0_i32 = arith.constant 0 : i32
    %c0_i32_0 = arith.constant 0 : i32
    return %arg0, %c0_i32 : i32, i32
  }
  func.func @transform_1(%arg0: i32, %arg1: i32) -> (i32, i32) {
    %c0_i32 = arith.constant 0 : i32
    %c0_i32_0 = arith.constant 0 : i32
    return %c0_i32, %arg1 : i32, i32
  }
  func.func @transform_2(%arg0: i32, %arg1: i32) -> (i32, i32) {
    %c0_i32 = arith.constant 0 : i32
    %c0_i32_0 = arith.constant 0 : i32
    return %arg1, %c0_i32 : i32, i32
  }
  func.func @transform_3(%arg0: i32, %arg1: i32) -> (i32, i32) {
    %c0_i32 = arith.constant 0 : i32
    %c0_i32_0 = arith.constant 0 : i32
    return %arg0, %c0_i32 : i32, i32
  }
}

</mosaic_0001>

<llo_original>
// kernel: expert_layer_prepared.1
$region0: #{expert_layer_prepared.1}
  #allocation0 [shape = 'u32[]', space=smem, size = 0x4, offset = 0x4, fixed_abs, tag = 'smem constant byte address 0x4 - core index']
  #allocation1 [shape = 'u32[144,128]{1,0:T(1,128)}', space=vmem, size = 0x12000, scoped, tag = 'internal scratch']
  %s0 = inlined_call_operand.vmem [shape: f32[16,128], index: 0, kind: input, shape index: {}]
  %s1 = inlined_call_operand.hbm [shape: f32[128,128], index: 1, kind: input, shape index: {}]
  %s2 = inlined_call_operand.hbm [shape: f32[128,128], index: 2, kind: input, shape index: {}]
  %s3 = inlined_call_operand.vmem [shape: f32[16,128], index: 3, kind: output, shape index: {}]
  %s4 = sld [smem:[#allocation0]]
  $region38: #{expert_layer_prepared.1} parent=0
    _
  %s6 = ssub.s32 1, %s4
  %s7 = scalar_select 0, %s6, %s4
  $region1: #{expert_layer_prepared.1} parent=0
    #allocation2 [shape = 'u8[65536]{0}', space=vmem, size = 0x10000, scoped, tag = 'input window, operand 1, single buffered']
    #allocation3 [shape = 's32[1]{0}', space=sflag, size = 0x4, scoped, tag = 'scoped memory for expert_layer_prepared.1']
    #allocation4 [shape = 'u8[65536]{0}', space=vmem, size = 0x10000, scoped, tag = 'input window, operand 2, single buffered']
    #allocation5 [shape = 's32[1]{0}', space=sflag, size = 0x4, scoped, tag = 'scoped memory for expert_layer_prepared.1']
    %8 = vsyncpa [#allocation3], 0
    %9 = vsyncpa [#allocation5], 0
    // Predicated region
    $region2: #{expert_layer_prepared.1} parent=1 // pred_check
      _
    $region3: #{expert_layer_prepared.1} parent=1 // pred_check_branch
      %11 = sbr.rel (0) target = $region5
    $region4: #{expert_layer_prepared.1} parent=1 // pred_region
      _
    $region5: #{expert_layer_prepared.1} parent=1 // pred_fallthru
      _
    // Predicated region
    $region6: #{expert_layer_prepared.1} parent=1 // pred_check
      _
    $region7: #{expert_layer_prepared.1} parent=1 // pred_check_branch
      %13 = sbr.rel (0) target = $region9
    $region8: #{expert_layer_prepared.1} parent=1 // pred_region
      %s15 = ssub.s32 2048, 2048
      %16 = vsyncadd [#allocation3], %s15
      %s17 = sshll.u32 [#allocation2], 4
      %s18 = int_to_ptr.vmem [resolvable:$true] %s17
      %23 = dma.hbm_to_vmem [thread:$0]  %s1, 2048, %s18, [#allocation3], 128, 128, 8
    $region9: #{expert_layer_prepared.1} parent=1 // pred_fallthru
      _
    // Predicated region
    $region10: #{expert_layer_prepared.1} parent=1 // pred_check
      _
    $region11: #{expert_layer_prepared.1} parent=1 // pred_check_branch
      %25 = sbr.rel (0) target = $region13
    $region12: #{expert_layer_prepared.1} parent=1 // pred_region
      %s27 = ssub.s32 2048, 2048
      %28 = vsyncadd [#allocation5], %s27
      %s29 = sshll.u32 [#allocation4], 4
      %s30 = int_to_ptr.vmem [resolvable:$true] %s29
      %35 = dma.hbm_to_vmem [thread:$0]  %s2, 2048, %s30, [#allocation5], 128, 128, 8
    $region13: #{expert_layer_prepared.1} parent=1 // pred_fallthru
      _
    // Predicated region
    $region14: #{expert_layer_prepared.1} parent=1 // pred_check
      _
    $region15: #{expert_layer_prepared.1} parent=1 // pred_check_branch
      %37 = sbr.rel (0) target = $region17
    $region16: #{expert_layer_prepared.1} parent=1 // pred_region
      %38 = dma.done [#allocation3], 2048
    $region17: #{expert_layer_prepared.1} parent=1 // pred_fallthru
      _
    // Predicated region
    $region18: #{expert_layer_prepared.1} parent=1 // pred_check
      _
    $region19: #{expert_layer_prepared.1} parent=1 // pred_check_branch
      %40 = sbr.rel (0) target = $region21
    $region20: #{expert_layer_prepared.1} parent=1 // pred_region
      %41 = dma.done [#allocation5], 2048
    $region21: #{expert_layer_prepared.1} parent=1 // pred_fallthru
      _
    %v42 = vld [vmem:[%s0] sm:$0xff]
    %v43 = vld [vmem:[%s0 + $0x8] sm:$0xff]
    %v44 = vld [vmem:[#allocation2] sm:$0xff]
    %v45 = vld [vmem:[#allocation2 + $0x8] sm:$0xff]
    %v46 = vld [vmem:[#allocation2 + $0x10] sm:$0xff]
    %v47 = vld [vmem:[#allocation2 + $0x18] sm:$0xff]
    %v48 = vld [vmem:[#allocation2 + $0x20] sm:$0xff]
    %v49 = vld [vmem:[#allocation2 + $0x28] sm:$0xff]
    %v50 = vld [vmem:[#allocation2 + $0x30] sm:$0xff]
    %v51 = vld [vmem:[#allocation2 + $0x38] sm:$0xff]
    %v52 = vld [vmem:[#allocation2 + $0x40] sm:$0xff]
    %v53 = vld [vmem:[#allocation2 + $0x48] sm:$0xff]
    %v54 = vld [vmem:[#allocation2 + $0x50] sm:$0xff]
    %v55 = vld [vmem:[#allocation2 + $0x58] sm:$0xff]
    %v56 = vld [vmem:[#allocation2 + $0x60] sm:$0xff]
    %v57 = vld [vmem:[#allocation2 + $0x68] sm:$0xff]
    %v58 = vld [vmem:[#allocation2 + $0x70] sm:$0xff]
    %v59 = vld [vmem:[#allocation2 + $0x78] sm:$0xff]
    %60 = vmatprep.subr.mxu0 0.0
    %61 = vmatpush1.msra.mxu0 %v59
    %62 = vmatprep.subr.mxu0 0.0
    %63 = vmatpush1.msra.mxu0 %v58
    %64 = vmatprep.subr.mxu0 0.0
    %65 = vmatpush1.msra.mxu0 %v57
    %66 = vmatprep.subr.mxu0 0.0
    %67 = vmatpush1.msra.mxu0 %v56
    %68 = vmatprep.subr.mxu0 0.0
    %69 = vmatpush1.msra.mxu0 %v55
    %70 = vmatprep.subr.mxu0 0.0
    %71 = vmatpush1.msra.mxu0 %v54
    %72 = vmatprep.subr.mxu0 0.0
    %73 = vmatpush1.msra.mxu0 %v53
    %74 = vmatprep.subr.mxu0 0.0
    %75 = vmatpush1.msra.mxu0 %v52
    %76 = vmatprep.subr.mxu0 0.0
    %77 = vmatpush1.msra.mxu0 %v51
    %78 = vmatprep.subr.mxu0 0.0
    %79 = vmatpush1.msra.mxu0 %v50
    %80 = vmatprep.subr.mxu0 0.0
    %81 = vmatpush1.msra.mxu0 %v49
    %82 = vmatprep.subr.mxu0 0.0
    %83 = vmatpush1.msra.mxu0 %v48
    %84 = vmatprep.subr.mxu0 0.0
    %85 = vmatpush1.msra.mxu0 %v47
    %86 = vmatprep.subr.mxu0 0.0
    %87 = vmatpush1.msra.mxu0 %v46
    %88 = vmatprep.subr.mxu0 0.0
    %89 = vmatpush1.msra.mxu0 %v45
    %90 = vmatprep.subr.mxu0 0.0
    %91 = vmatpush1.msra.mxu0 %v44
    %92 = vmatprep.subr.mxu0 0.0
    %93 = vmatpush2.msra.mxu0 0.0
    %94 = vmatprep.subr.mxu0 0.0
    %95 = vmatpush2.msra.mxu0 0.0
    %96 = vmatprep.subr.mxu0 0.0
    %97 = vmatpush2.msra.mxu0 0.0
    %98 = vmatprep.subr.mxu0 0.0
    %99 = vmatpush2.msra.mxu0 0.0
    %100 = vmatprep.subr.mxu0 0.0
    %101 = vmatpush2.msra.mxu0 0.0
    %102 = vmatprep.subr.mxu0 0.0
    %103 = vmatpush2.msra.mxu0 0.0
    %104 = vmatprep.subr.mxu0 0.0
    %105 = vmatpush2.msra.mxu0 0.0
    %106 = vmatprep.subr.mxu0 0.0
    %107 = vmatpush2.msra.mxu0 0.0
    %108 = vmatprep.subr.mxu0 0.0
    %109 = vmatpush2.msra.mxu0 0.0
    %110 = vmatprep.subr.mxu0 0.0
    %111 = vmatpush2.msra.mxu0 0.0
    %112 = vmatprep.subr.mxu0 0.0
    %113 = vmatpush2.msra.mxu0 0.0
    %114 = vmatprep.subr.mxu0 0.0
    %115 = vmatpush2.msra.mxu0 0.0
    %116 = vmatprep.subr.mxu0 0.0
    %117 = vmatpush2.msra.mxu0 0.0
    %118 = vmatprep.subr.mxu0 0.0
    %119 = vmatpush2.msra.mxu0 0.0
    %120 = vmatprep.subr.mxu0 0.0
    %121 = vmatpush2.msra.mxu0 0.0
    %122 = vmatprep.subr.mxu0 0.0
    %123 = vmatpush2.msra.mxu0 0.0
    %124 = vmatprep.mubr.f32.mxu0 0.0
    %125 = vmatmul.mubr.f32.gmra.mxu0 %v42
    %v126 = vpop.f32.mrf.mxu0
    %v127 = vadd.f32 0.0, %v126
    %v128 = vpop.f32.mrf.mxu0
    %129 = vmatprep.mubr.f32.mxu0 0.0
    %130 = vmatmul.mubr.f32.gmra.mxu0 %v43
    %v131 = vpop.f32.mrf.mxu0
    %v132 = vadd.f32 0.0, %v131
    %v133 = vpop.f32.mrf.mxu0
    %134 = vdwg.mxu0
    %v135 = vxor.u32 %v127, 2147483648
    %v136 = vxor.u32 %v132, 2147483648
    %v137 = vmul.f32 %v135, 1.442695
    %v138 = vpow.pop %v137
    %v139 = vmul.f32 %v136, 1.442695
    %v140 = vpow.pop %v139
    %v141 = vadd.f32 %v138, 1.0
    %v142 = vadd.f32 %v140, 1.0
    %v143 = vrcp.pop %v141
    %v144 = vmul.f32 1.0, %v143
    %v145 = vrcp.pop %v142
    %v146 = vmul.f32 1.0, %v145
    %v147 = vmul.f32 %v127, %v144
    %v148 = vmul.f32 %v132, %v146
    %v149 = vld [vmem:[#allocation4] sm:$0xff]
    %v150 = vld [vmem:[#allocation4 + $0x8] sm:$0xff]
    %v151 = vld [vmem:[#allocation4 + $0x10] sm:$0xff]
    %v152 = vld [vmem:[#allocation4 + $0x18] sm:$0xff]
    %v153 = vld [vmem:[#allocation4 + $0x20] sm:$0xff]
    %v154 = vld [vmem:[#allocation4 + $0x28] sm:$0xff]
    %v155 = vld [vmem:[#allocation4 + $0x30] sm:$0xff]
    %v156 = vld [vmem:[#allocation4 + $0x38] sm:$0xff]
    %v157 = vld [vmem:[#allocation4 + $0x40] sm:$0xff]
    %v158 = vld [vmem:[#allocation4 + $0x48] sm:$0xff]
    %v159 = vld [vmem:[#allocation4 + $0x50] sm:$0xff]
    %v160 = vld [vmem:[#allocation4 + $0x58] sm:$0xff]
    %v161 = vld [vmem:[#allocation4 + $0x60] sm:$0xff]
    %v162 = vld [vmem:[#allocation4 + $0x68] sm:$0xff]
    %v163 = vld [vmem:[#allocation4 + $0x70] sm:$0xff]
    %v164 = vld [vmem:[#allocation4 + $0x78] sm:$0xff]
    %165 = vmatprep.subr.mxu0 0.0
    %166 = vmatpush1.msra.mxu0 %v164
    %167 = vmatprep.subr.mxu0 0.0
    %168 = vmatpush1.msra.mxu0 %v163
    %169 = vmatprep.subr.mxu0 0.0
    %170 = vmatpush1.msra.mxu0 %v162
    %171 = vmatprep.subr.mxu0 0.0
    %172 = vmatpush1.msra.mxu0 %v161
    %173 = vmatprep.subr.mxu0 0.0
    %174 = vmatpush1.msra.mxu0 %v160
    %175 = vmatprep.subr.mxu0 0.0
    %176 = vmatpush1.msra.mxu0 %v159
    %177 = vmatprep.subr.mxu0 0.0
    %178 = vmatpush1.msra.mxu0 %v158
    %179 = vmatprep.subr.mxu0 0.0
    %180 = vmatpush1.msra.mxu0 %v157
    %181 = vmatprep.subr.mxu0 0.0
    %182 = vmatpush1.msra.mxu0 %v156
    %183 = vmatprep.subr.mxu0 0.0
    %184 = vmatpush1.msra.mxu0 %v155
    %185 = vmatprep.subr.mxu0 0.0
    %186 = vmatpush1.msra.mxu0 %v154
    %187 = vmatprep.subr.mxu0 0.0
    %188 = vmatpush1.msra.mxu0 %v153
    %189 = vmatprep.subr.mxu0 0.0
    %190 = vmatpush1.msra.mxu0 %v152
    %191 = vmatprep.subr.mxu0 0.0
    %192 = vmatpush1.msra.mxu0 %v151
    %193 = vmatprep.subr.mxu0 0.0
    %194 = vmatpush1.msra.mxu0 %v150
    %195 = vmatprep.subr.mxu0 0.0
    %196 = vmatpush1.msra.mxu0 %v149
    %197 = vmatprep.subr.mxu0 0.0
    %198 = vmatpush2.msra.mxu0 0.0
    %199 = vmatprep.subr.mxu0 0.0
    %200 = vmatpush2.msra.mxu0 0.0
    %201 = vmatprep.subr.mxu0 0.0
    %202 = vmatpush2.msra.mxu0 0.0
    %203 = vmatprep.subr.mxu0 0.0
    %204 = vmatpush2.msra.mxu0 0.0
    %205 = vmatprep.subr.mxu0 0.0
    %206 = vmatpush2.msra.mxu0 0.0
    %207 = vmatprep.subr.mxu0 0.0
    %208 = vmatpush2.msra.mxu0 0.0
    %209 = vmatprep.subr.mxu0 0.0
    %210 = vmatpush2.msra.mxu0 0.0
    %211 = vmatprep.subr.mxu0 0.0
    %212 = vmatpush2.msra.mxu0 0.0
    %213 = vmatprep.subr.mxu0 0.0
    %214 = vmatpush2.msra.mxu0 0.0
    %215 = vmatprep.subr.mxu0 0.0
    %216 = vmatpush2.msra.mxu0 0.0
    %217 = vmatprep.subr.mxu0 0.0
    %218 = vmatpush2.msra.mxu0 0.0
    %219 = vmatprep.subr.mxu0 0.0
    %220 = vmatpush2.msra.mxu0 0.0
    %221 = vmatprep.subr.mxu0 0.0
    %222 = vmatpush2.msra.mxu0 0.0
    %223 = vmatprep.subr.mxu0 0.0
    %224 = vmatpush2.msra.mxu0 0.0
    %225 = vmatprep.subr.mxu0 0.0
    %226 = vmatpush2.msra.mxu0 0.0
    %227 = vmatprep.subr.mxu0 0.0
    %228 = vmatpush2.msra.mxu0 0.0
    %229 = vmatprep.mubr.f32.mxu0 0.0
    %230 = vmatmul.mubr.f32.gmra.mxu0 %v147
    %v231 = vpop.f32.mrf.mxu0
    %v232 = vadd.f32 0.0, %v231
    %v233 = vpop.f32.mrf.mxu0
    %234 = vmatprep.mubr.f32.mxu0 0.0
    %235 = vmatmul.mubr.f32.gmra.mxu0 %v148
    %v236 = vpop.f32.mrf.mxu0
    %v237 = vadd.f32 0.0, %v236
    %v238 = vpop.f32.mrf.mxu0
    %239 = vdwg.mxu0
    %p240 = scmp.eq.s32.totalorder 0, 0
    // Predicated region
    $region22: #{expert_layer_prepared.1} parent=1 // pred_check
      %p241 = pneg %p240
    $region23: #{expert_layer_prepared.1} parent=1 // pred_check_branch
      %243 = sbr.rel (%p241) target = $region25
    $region24: #{expert_layer_prepared.1} parent=1 // pred_region
      %244 = vst [vmem:[%s3] sm:$0xff] %v232
      %245 = vst [vmem:[%s3 + $0x8] sm:$0xff] %v237
    $region25: #{expert_layer_prepared.1} parent=1 // pred_fallthru
      _
    %p246 = scmp.ne.s32.totalorder 0, 0
    // Predicated region
    $region26: #{expert_layer_prepared.1} parent=1 // pred_check
      %p247 = pneg %p246
    $region27: #{expert_layer_prepared.1} parent=1 // pred_check_branch
      %249 = sbr.rel (%p247) target = $region29
    $region28: #{expert_layer_prepared.1} parent=1 // pred_region
      %v250 = vld [vmem:[%s3] sm:$0xff]
      %v251 = vld [vmem:[%s3 + $0x8] sm:$0xff]
      %v252 = vadd.f32 %v250, %v232
      %v253 = vadd.f32 %v251, %v237
      %254 = vst [vmem:[%s3] sm:$0xff] %v252
      %255 = vst [vmem:[%s3 + $0x8] sm:$0xff] %v253
    $region29: #{expert_layer_prepared.1} parent=1 // pred_fallthru
      _
    // Predicated region
    $region30: #{expert_layer_prepared.1} parent=1 // pred_check
      _
    $region31: #{expert_layer_prepared.1} parent=1 // pred_check_branch
      %257 = sbr.rel (0) target = $region33
    $region32: #{expert_layer_prepared.1} parent=1 // pred_region
      _
    $region33: #{expert_layer_prepared.1} parent=1 // pred_fallthru
      _
    // Predicated region
    $region34: #{expert_layer_prepared.1} parent=1 // pred_check
      _
    $region35: #{expert_layer_prepared.1} parent=1 // pred_check_branch
      %259 = sbr.rel (0) target = $region37
    $region36: #{expert_layer_prepared.1} parent=1 // pred_region
      _
    $region37: #{expert_layer_prepared.1} parent=1 // pred_fallthru
      _
    %260 = vsyncpa [#allocation3], 1
    %261 = vsyncpa [#allocation5], 1

</llo_original>
